<compile_context>
chip_gen: v7x
topology: tpu7x:2x2x1
jax: 0.10.0
libtpu: 0.0.40
codegen_flags: <defaults>
</compile_context>

<pallas_src>
import jax
import jax.numpy as jnp
from jax.experimental import pallas as pl
from jax.experimental.pallas import tpu as pltpu


def _round_up(x, m):
    return ((x + m - 1) // m) * m


# ---------------------------------------------------------------------------
# Fused stage kernel: one grid step == one GCN layer; l2norm fused on last.
# ---------------------------------------------------------------------------
def fused_stage_kernel(a_hbm, x_hbm, w_ref, b_ref, o_ref,
                       a_vmem, xs_ref, sem):
    """Refs:
      a_hbm : [Np, Np] bf16 HBM  normalized adjacency (memory_space=pl.ANY)
      x_hbm : [Np, Dp] bf16 HBM  padded input features (memory_space=pl.ANY)
      w_ref : [Dp, Dp] bf16 VMEM this layer's padded weight (auto-pipelined)
      b_ref : [1, Dp]  f32  VMEM this layer's padded bias   (auto-pipelined)
      o_ref : [Np, Dp] bf16 VMEM final padded output (written on last step)
      a_vmem: [Np, Np] bf16 VMEM scratch: single-buffered resident adjacency
      xs_ref: [Np, Dp] bf16 VMEM scratch carrying activations across layers
      sem   : DMA semaphores, shape (2,)
    """
    layer = pl.program_id(0)
    last = pl.num_programs(0) - 1

    # One-time DMA of the grid-constant operands into single-buffered VMEM.
    @pl.when(layer == 0)
    def _():
        cp_a = pltpu.make_async_copy(a_hbm, a_vmem, sem.at[0])
        cp_x = pltpu.make_async_copy(x_hbm, xs_ref, sem.at[1])
        cp_a.start()
        cp_x.start()
        cp_a.wait()
        cp_x.wait()

    # h = X @ W        (bf16 operands, f32 accumulation on the MXU)
    h = jnp.dot(xs_ref[...], w_ref[...], preferred_element_type=jnp.float32)
    # agg = A_hat @ h, bias added AFTER aggregation (matches PyG GCNConv).
    agg = jnp.dot(a_vmem[...], h.astype(jnp.bfloat16),
                  preferred_element_type=jnp.float32)
    act = jnp.maximum(agg + b_ref[...], 0.0)          # ReLU epilogue in f32
    xs_ref[...] = act.astype(jnp.bfloat16)

    @pl.when(layer == last)
    def _():
        # F.normalize(x, p=2, dim=-1) with eps=1e-12. Padded columns are zero,
        # so the padded sum-of-squares equals the true row norm.
        ss = jnp.sum(act * act, axis=-1, keepdims=True)
        inv = jax.lax.rsqrt(jnp.maximum(ss, 1e-24))    # == 1/max(||x||, 1e-12)
        o_ref[...] = (act * inv).astype(o_ref.dtype)


# ---------------------------------------------------------------------------
# Wrappers
# ---------------------------------------------------------------------------
def pad_adjacency(a_norm):
    """Pad + bf16-cast the N^2 adjacency ONCE (hoisted out of the stage call)."""
    n = a_norm.shape[0]
    n_pad = _round_up(max(n, 128), 128)      # lane-dense: N multiple of 128
    return (jnp.zeros((n_pad, n_pad), jnp.bfloat16)
            .at[:n, :n].set(a_norm.astype(jnp.bfloat16)))


@jax.jit
def gnn_stack_stage(x, a_padded, weights, biases):
    """Forward pass of GNNStackStage.

    x:        [N, dim_in]      f32 node features
    a_padded: [N_pad, N_pad]   bf16 pre-padded normalized adjacency
                               (see pad_adjacency; N_pad a multiple of 128)
    weights:  list of [d_in_i, dim_out] f32
    biases:   list of [1, dim_out]      f32
    """
    n, dim_in = x.shape
    dim_out = weights[0].shape[1]
    num_layers = len(weights)
    n_pad = a_padded.shape[0]

    # d_pad = 128 for small hidden dims; bump to 256 only when dim_out grows
    # toward the v6e/v7x 256-wide MXU.
    d_pad = _round_up(max(dim_in, dim_out, 128), 128)

    # Small per-call padding (x, W, b). Matmul operands go to bf16.
    x_p = (jnp.zeros((n_pad, d_pad), jnp.bfloat16)
           .at[:n, :dim_in].set(x.astype(jnp.bfloat16)))
    w_p = jnp.stack([
        jnp.zeros((d_pad, d_pad), jnp.bfloat16)
        .at[:w.shape[0], :dim_out].set(w.astype(jnp.bfloat16))
        for w in weights])
    b_p = jnp.stack([
        jnp.zeros((1, d_pad), jnp.float32).at[:, :dim_out].set(b)
        for b in biases])

    # VMEM footprint: single-buffered A + activation carry + double-buffered
    # per-layer W/b + double-buffered bf16 output block, plus headroom.
    vmem_bytes = (
        n_pad * n_pad * 2          # resident A (bf16), 1 buffer (scratch)
        + n_pad * d_pad * 2        # activation carry (bf16 scratch)
        + 2 * d_pad * d_pad * 2    # W_l, double-buffered
        + 2 * d_pad * 4            # b_l, double-buffered
        + 2 * n_pad * d_pad * 2    # bf16 output block, double-buffered
    )
    vmem_limit = min(max(int(vmem_bytes * 1.25) + (2 << 20), 32 << 20),
                     100 << 20)

    out_p = pl.pallas_call(
        fused_stage_kernel,
        out_shape=jax.ShapeDtypeStruct((n_pad, d_pad), jnp.bfloat16),
        grid=(num_layers,),
        in_specs=[
            pl.BlockSpec(memory_space=pl.ANY),                        # A (HBM)
            pl.BlockSpec(memory_space=pl.ANY),                        # x (HBM)
            pl.BlockSpec((None, d_pad, d_pad), lambda l: (l, 0, 0)),  # W_l
            pl.BlockSpec((None, 1, d_pad), lambda l: (l, 0, 0)),      # b_l
        ],
        out_specs=pl.BlockSpec((n_pad, d_pad), lambda l: (0, 0)),
        scratch_shapes=[
            pltpu.VMEM((n_pad, n_pad), jnp.bfloat16),   # resident A
            pltpu.VMEM((n_pad, d_pad), jnp.bfloat16),   # activation carry
            pltpu.SemaphoreType.DMA((2,)),
        ],
        compiler_params=pltpu.CompilerParams(
            dimension_semantics=("arbitrary",),          # layers are sequential
            vmem_limit_bytes=vmem_limit),
    )(a_padded, x_p, w_p, b_p)

    return out_p[:n, :dim_out].astype(jnp.float32)


# ---------------------------------------------------------------------------
# Pure-JAX reference (f32) for correctness checking.
# ---------------------------------------------------------------------------
def reference_stage(x, a_norm, weights, biases):
    for w, b in zip(weights, biases):
        x = jnp.maximum(a_norm @ (x @ w) + b, 0.0)
    nrm = jnp.linalg.norm(x, axis=-1, keepdims=True)
    return x / jnp.maximum(nrm, 1e-12)


# ---------------------------------------------------------------------------
# Deterministic parameter / input construction (in-script).
# ---------------------------------------------------------------------------
def build_params(key, dim_in, dim_out, num_layers):
    weights, biases = [], []
    for i in range(num_layers):
        d_in = dim_in if i == 0 else dim_out
        key, kw, kb = jax.random.split(key, 3)
        scale = 1.0 / jnp.sqrt(jnp.float32(d_in))  # glorot-ish init
        w = jax.random.uniform(kw, (d_in, dim_out), jnp.float32,
                               minval=-scale, maxval=scale)
        b = jax.random.uniform(kb, (1, dim_out), jnp.float32,
                               minval=-scale, maxval=scale)
        weights.append(w)
        biases.append(b)
    return weights, biases


def build_normalized_adjacency(key, n):
    """Dense symmetric random graph -> D^-1/2 (A + I) D^-1/2."""
    a = (jax.random.uniform(key, (n, n)) < 0.1).astype(jnp.float32)
    a = jnp.maximum(a, a.T)                       # symmetrize
    a = a * (1.0 - jnp.eye(n)) + jnp.eye(n)       # add self-loops
    deg = jnp.sum(a, axis=-1)
    d_inv_sqrt = 1.0 / jnp.sqrt(jnp.maximum(deg, 1.0))
    return a * d_inv_sqrt[:, None] * d_inv_sqrt[None, :]


if __name__ == "__main__":
    N = 128          # number of nodes
    DIM_IN = 32      # input feature dim
    DIM_OUT = 32     # hidden / output feature dim
    NUM_LAYERS = 3

    key = jax.random.PRNGKey(0)
    kx, ka, kp = jax.random.split(key, 3)

    x = jax.random.normal(kx, (N, DIM_IN), jnp.float32)
    a_norm = build_normalized_adjacency(ka, N)
    weights, biases = build_params(kp, DIM_IN, DIM_OUT, NUM_LAYERS)

    # Pad / bf16-cast the N^2 adjacency once, outside the stage call.
    a_padded = jax.block_until_ready(pad_adjacency(a_norm))

    out = gnn_stack_stage(x, a_padded, weights, biases)
    out = jax.block_until_ready(out)

    # sanity checks: shape, unit-ish row norms, agreement with f32 reference
    assert out.shape == (N, DIM_OUT)
    row_norms = jnp.linalg.norm(out, axis=-1)
    assert bool(jnp.all(row_norms < 1.0 + 1e-2)), "l2norm failed"
    ref = reference_stage(x, a_norm, weights, biases)
    max_err = float(jnp.max(jnp.abs(out - ref)))
    assert max_err < 6e-2, f"mismatch vs f32 reference: max_err={max_err}"

    print("KERNEL_OK")
</pallas_src>

<mosaic_0001>
module attributes {stable_mosaic.version = 11 : i64} {
  func.func @fused_stage_kernel(%arg0: i32, %arg1: memref<128x128xbf16, #tpu.memory_space<any>>, %arg2: memref<128x128xbf16, #tpu.memory_space<any>>, %arg3: memref<1x128x128xbf16, #tpu.memory_space<vmem>>, %arg4: memref<1x1x128xf32, #tpu.memory_space<vmem>>, %arg5: memref<128x128xbf16, #tpu.memory_space<vmem>>, %arg6: memref<128x128xbf16, #tpu.memory_space<vmem>>, %arg7: memref<128x128xbf16, #tpu.memory_space<vmem>>, %arg8: memref<2x!tpu.dma_semaphore, #tpu.memory_space<semaphore_mem>>) attributes {dimension_semantics = [#tpu.dimension_semantics<arbitrary>], iteration_bounds = array<i64: 3>, scalar_prefetch = 0 : i64, scratch_operands = 3 : i64, tpu.core_type = #tpu.core_type<tc>, window_params = [{}, {}, {transform_indices = @transform_2, window_bounds = array<i64: 1, 128, 128>}, {transform_indices = @transform_3, window_bounds = array<i64: 1, 1, 128>}, {pipeline_mode = #tpu.pipeline_mode<synchronous>, transform_indices = @transform_4, window_bounds = array<i64: 128, 128>}]} {
    %c0_i32 = arith.constant 0 : i32
    %0 = arith.cmpi eq, %arg0, %c0_i32 : i32
    %1 = arith.extui %0 : i1 to i32
    %c0_i32_0 = arith.constant 0 : i32
    %2 = arith.cmpi ne, %1, %c0_i32_0 : i32
    scf.if %2 {
      %c0_i32_15 = arith.constant 0 : i32
      %21 = tpu.memref_slice %arg8[%c0_i32_15] : memref<2x!tpu.dma_semaphore, #tpu.memory_space<semaphore_mem>> -> memref<1x!tpu.dma_semaphore, #tpu.memory_space<semaphore_mem>>
      %22 = tpu.memref_squeeze %21 : memref<1x!tpu.dma_semaphore, #tpu.memory_space<semaphore_mem>> -> memref<!tpu.dma_semaphore, #tpu.memory_space<semaphore_mem>>
      tpu.enqueue_dma source(%arg1 : memref<128x128xbf16, #tpu.memory_space<any>>) target(%arg6 : memref<128x128xbf16, #tpu.memory_space<vmem>>) target_semaphore(%22 : memref<!tpu.dma_semaphore, #tpu.memory_space<semaphore_mem>>)
      %c1_i32 = arith.constant 1 : i32
      %23 = tpu.memref_slice %arg8[%c1_i32] : memref<2x!tpu.dma_semaphore, #tpu.memory_space<semaphore_mem>> -> memref<1x!tpu.dma_semaphore, #tpu.memory_space<semaphore_mem>>
      %24 = tpu.memref_squeeze %23 : memref<1x!tpu.dma_semaphore, #tpu.memory_space<semaphore_mem>> -> memref<!tpu.dma_semaphore, #tpu.memory_space<semaphore_mem>>
      tpu.enqueue_dma source(%arg2 : memref<128x128xbf16, #tpu.memory_space<any>>) target(%arg7 : memref<128x128xbf16, #tpu.memory_space<vmem>>) target_semaphore(%24 : memref<!tpu.dma_semaphore, #tpu.memory_space<semaphore_mem>>)
      %c0_i32_16 = arith.constant 0 : i32
      %25 = tpu.memref_slice %arg8[%c0_i32_16] : memref<2x!tpu.dma_semaphore, #tpu.memory_space<semaphore_mem>> -> memref<1x!tpu.dma_semaphore, #tpu.memory_space<semaphore_mem>>
      %26 = tpu.memref_squeeze %25 : memref<1x!tpu.dma_semaphore, #tpu.memory_space<semaphore_mem>> -> memref<!tpu.dma_semaphore, #tpu.memory_space<semaphore_mem>>
      tpu.wait_dma2 semaphore(%26 : memref<!tpu.dma_semaphore, #tpu.memory_space<semaphore_mem>>) src(%arg1 : memref<128x128xbf16, #tpu.memory_space<any>>) dst(%arg6 : memref<128x128xbf16, #tpu.memory_space<vmem>>)
      %c1_i32_17 = arith.constant 1 : i32
      %27 = tpu.memref_slice %arg8[%c1_i32_17] : memref<2x!tpu.dma_semaphore, #tpu.memory_space<semaphore_mem>> -> memref<1x!tpu.dma_semaphore, #tpu.memory_space<semaphore_mem>>
      %28 = tpu.memref_squeeze %27 : memref<1x!tpu.dma_semaphore, #tpu.memory_space<semaphore_mem>> -> memref<!tpu.dma_semaphore, #tpu.memory_space<semaphore_mem>>
      tpu.wait_dma2 semaphore(%28 : memref<!tpu.dma_semaphore, #tpu.memory_space<semaphore_mem>>) src(%arg2 : memref<128x128xbf16, #tpu.memory_space<any>>) dst(%arg7 : memref<128x128xbf16, #tpu.memory_space<vmem>>)
    } else {
    }
    %c0 = arith.constant 0 : index
    %c0_1 = arith.constant 0 : index
    %3 = vector.load %arg7[%c0, %c0_1] : memref<128x128xbf16, #tpu.memory_space<vmem>>, vector<128x128xbf16>
    %c0_2 = arith.constant 0 : index
    %c0_3 = arith.constant 0 : index
    %c0_4 = arith.constant 0 : index
    %4 = vector.load %arg3[%c0_2, %c0_3, %c0_4] : memref<1x128x128xbf16, #tpu.memory_space<vmem>>, vector<1x128x128xbf16>
    %5 = vector.shape_cast %4 : vector<1x128x128xbf16> to vector<128x128xbf16>
    %cst = arith.constant dense<0.000000e+00> : vector<128x128xf32>
    %6 = tpu.matmul %3, %5, %cst {dimension_numbers = #tpu.dot_dimension_numbers<[1], [0], [0], [1], [0, 0, 1, 1], [], []>} : vector<128x128xbf16>, vector<128x128xbf16>, vector<128x128xf32> -> vector<128x128xf32>
    %c0_5 = arith.constant 0 : index
    %c0_6 = arith.constant 0 : index
    %7 = vector.load %arg6[%c0_5, %c0_6] : memref<128x128xbf16, #tpu.memory_space<vmem>>, vector<128x128xbf16>
    %8 = arith.truncf %6 : vector<128x128xf32> to vector<128x128xbf16>
    %cst_7 = arith.constant dense<0.000000e+00> : vector<128x128xf32>
    %9 = tpu.matmul %7, %8, %cst_7 {dimension_numbers = #tpu.dot_dimension_numbers<[1], [0], [0], [1], [0, 0, 1, 1], [], []>} : vector<128x128xbf16>, vector<128x128xbf16>, vector<128x128xf32> -> vector<128x128xf32>
    %c0_8 = arith.constant 0 : index
    %c0_9 = arith.constant 0 : index
    %c0_10 = arith.constant 0 : index
    %10 = vector.load %arg4[%c0_8, %c0_9, %c0_10] : memref<1x1x128xf32, #tpu.memory_space<vmem>>, vector<1x1x128xf32>
    %11 = vector.shape_cast %10 : vector<1x1x128xf32> to vector<1x128xf32>
    %12 = vector.broadcast %11 : vector<1x128xf32> to vector<128x128xf32>
    %13 = arith.addf %9, %12 : vector<128x128xf32>
    %cst_11 = arith.constant 0.000000e+00 : f32
    %14 = vector.broadcast %cst_11 : f32 to vector<128x128xf32>
    %15 = arith.maximumf %13, %14 : vector<128x128xf32>
    %16 = arith.truncf %15 : vector<128x128xf32> to vector<128x128xbf16>
    %c0_12 = arith.constant 0 : index
    %c0_13 = arith.constant 0 : index
    %17 = vector.load %arg7[%c0_12, %c0_13] : memref<128x128xbf16, #tpu.memory_space<vmem>>, vector<128x128xbf16>
    tpu.vector_store %arg7[%c0_12, %c0_13], %16 {strides = array<i32>} : memref<128x128xbf16, #tpu.memory_space<vmem>>, vector<128x128xbf16>,
    %c2_i32 = arith.constant 2 : i32
    %18 = arith.cmpi eq, %arg0, %c2_i32 : i32
    %19 = arith.extui %18 : i1 to i32
    %c0_i32_14 = arith.constant 0 : i32
    %20 = arith.cmpi ne, %19, %c0_i32_14 : i32
    scf.if %20 {
      %21 = arith.mulf %15, %15 : vector<128x128xf32>
      %cst_15 = arith.constant dense<0.000000e+00> : vector<128xf32>
      %22 = vector.multi_reduction <add>, %21, %cst_15 [1] : vector<128x128xf32> to vector<128xf32>
      %23 = vector.shape_cast %22 : vector<128xf32> to vector<128x1xf32>
      %cst_16 = arith.constant 1.000000e-24 : f32
      %24 = vector.broadcast %cst_16 : f32 to vector<128x1xf32>
      %25 = arith.maximumf %23, %24 : vector<128x1xf32>
      %26 = math.rsqrt %25 : vector<128x1xf32>
      %27 = vector.broadcast %26 : vector<128x1xf32> to vector<128x128xf32>
      %28 = arith.mulf %15, %27 : vector<128x128xf32>
      %29 = arith.truncf %28 : vector<128x128xf32> to vector<128x128xbf16>
      %c0_17 = arith.constant 0 : index
      %c0_18 = arith.constant 0 : index
      %30 = vector.load %arg5[%c0_17, %c0_18] : memref<128x128xbf16, #tpu.memory_space<vmem>>, vector<128x128xbf16>
      tpu.vector_store %arg5[%c0_17, %c0_18], %29 {strides = array<i32>} : memref<128x128xbf16, #tpu.memory_space<vmem>>, vector<128x128xbf16>,
    } else {
    }
    return
  }
  func.func @transform_2(%arg0: i32) -> (i32, i32, i32) {
    %c0_i32 = arith.constant 0 : i32
    %c0_i32_0 = arith.constant 0 : i32
    %c0_i32_1 = arith.constant 0 : i32
    return %arg0, %c0_i32, %c0_i32_0 : i32, i32, i32
  }
  func.func @transform_3(%arg0: i32) -> (i32, i32, i32) {
    %c0_i32 = arith.constant 0 : i32
    %c0_i32_0 = arith.constant 0 : i32
    %c0_i32_1 = arith.constant 0 : i32
    return %arg0, %c0_i32, %c0_i32_0 : i32, i32, i32
  }
  func.func @transform_4(%arg0: i32) -> (i32, i32) {
    %c0_i32 = arith.constant 0 : i32
    %c0_i32_0 = arith.constant 0 : i32
    %c0_i32_1 = arith.constant 0 : i32
    return %c0_i32, %c0_i32_0 : i32, i32
  }
}

</mosaic_0001>

<llo_original>
// kernel: gnn_stack_stage.1
$region0: #{gnn_stack_stage.1}
  #allocation0 [shape = 'u32[]', space=smem, size = 0x4, offset = 0x4, fixed_abs, tag = 'smem constant byte address 0x4 - core index']
  #allocation1 [shape = 'u32[144,128]{1,0:T(1,128)}', space=vmem, size = 0x12000, scoped, tag = 'internal scratch']
  #allocation2 [shape = 'bf16[128,128]{1,0:T(16,128)(2,1)}', space=vmem, size = 0x8000, scoped, tag = 'scratch operand']
  #allocation3 [shape = 'bf16[128,128]{1,0:T(16,128)(2,1)}', space=vmem, size = 0x8000, scoped, tag = 'scratch operand']
  #allocation4 [shape = 's32[2]{0}', space=sflag, size = 0x8, scoped, tag = 'scratch operand']
  #allocation5 [shape = 's32[]', space=sflag, size = 0x4, offset = 0, fixed_abs, tag = 'sflag constant byte address 0x0 - dummy sync flag']
  #allocation6 [shape = 's32[]', space=sflag, size = 0x4, offset = 0, fixed_abs, tag = 'sflag constant byte address 0x0 - dummy sync flag']
  %s0 = inlined_call_operand.vmem [shape: bf16[128,128], index: 0, kind: input, shape index: {}]
  %s1 = inlined_call_operand.vmem [shape: bf16[128,128], index: 1, kind: input, shape index: {}]
  %s2 = inlined_call_operand.vmem [shape: bf16[3,128,128], index: 2, kind: input, shape index: {}]
  %s3 = inlined_call_operand.vmem [shape: f32[3,1,128], index: 3, kind: input, shape index: {}]
  %s4 = inlined_call_operand.vmem [shape: bf16[128,128], index: 4, kind: output, shape index: {}]
  %s5 = sld [smem:[#allocation0]]
  $region117: #{gnn_stack_stage.1} parent=0
    _
  %s7 = ssub.s32 1, %s5
  %s8 = scalar_select 0, %s7, %s5
  loop: start=0, step=1, limit=5
  $region2: #{gnn_stack_stage.1} parent=0 // loop_pre_header
    _
  $region3: #{gnn_stack_stage.1} parent=0 // loop_header
    %s10 = sphi 0, %s14
    %p11 = scmp.ge.s32.totalorder %s10, 5
    %s20 = sphi 0, %s22
    %s23 = sphi 0, %s20
    %s24 = sphi 0, %s23
    %s40 = sphi 0, %s24
    %s46 = sphi 0, %s48
    %s49 = sphi 0, %s46
    %s50 = sphi 0, %s49
    %s66 = sphi 0, %s50
    %s70 = sphi 0, %s70
    %s72 = sphi 0, %s70
    %s73 = sphi 0, %s72
    %s87 = sphi 0, %s73
  $region4: #{gnn_stack_stage.1} parent=0 // loop_header_branch
    %13 = sbr.rel (%p11) target = $region8
  $region5: #{gnn_stack_stage.1} parent=0 // loop_body
    %s15 = ssub.s32 %s10, 1
    %s16 = ssub.s32 %s10, 2
    %s17 = sadd.s32 %s10, 1
    %s18 = ssub.s32 %s10, %s17
    %p19 = scmp.eq.s32.totalorder %s18, 0
    %s21 = sadd.s32 %s20, 1
    %s22 = scalar_select %p19, %s20, %s21
    %p25 = pneg %p19
    %p26 = scmp.eq.s32.totalorder %s10, 2
    %p27 = por %p25, %p26
    %p28 = scmp.ne.s32.totalorder %s20, %s23
    %p29 = scmp.eq.s32.totalorder %s10, 0
    %p30 = por %p28, %p29
    %p31 = scmp.ne.s32.totalorder %s20, %s23
    %p32 = scmp.eq.s32.totalorder %s15, 2
    %p33 = por %p31, %p32
    %p34 = scmp.ne.s32.totalorder %s23, %s24
    %p35 = scmp.eq.s32.totalorder %s15, 0
    %p36 = por %p34, %p35
    %p37 = scmp.ne.s32.totalorder %s23, %s24
    %p38 = scmp.eq.s32.totalorder %s16, 2
    %p39 = por %p37, %p38
    %p41 = scmp.ne.s32.totalorder %s24, %s40
    %p42 = scmp.eq.s32.totalorder %s16, 0
    %p43 = por %p41, %p42
    %s44 = ssub.s32 %s10, %s17
    %p45 = scmp.eq.s32.totalorder %s44, 0
    %s47 = sadd.s32 %s46, 1
    %s48 = scalar_select %p45, %s46, %s47
    %p51 = pneg %p45
    %p52 = scmp.eq.s32.totalorder %s10, 2
    %p53 = por %p51, %p52
    %p54 = scmp.ne.s32.totalorder %s46, %s49
    %p55 = scmp.eq.s32.totalorder %s10, 0
    %p56 = por %p54, %p55
    %p57 = scmp.ne.s32.totalorder %s46, %s49
    %p58 = scmp.eq.s32.totalorder %s15, 2
    %p59 = por %p57, %p58
    %p60 = scmp.ne.s32.totalorder %s49, %s50
    %p61 = scmp.eq.s32.totalorder %s15, 0
    %p62 = por %p60, %p61
    %p63 = scmp.ne.s32.totalorder %s49, %s50
    %p64 = scmp.eq.s32.totalorder %s16, 2
    %p65 = por %p63, %p64
    %p67 = scmp.ne.s32.totalorder %s50, %s66
    %p68 = scmp.eq.s32.totalorder %s16, 0
    %p69 = por %p67, %p68
    %s71 = sadd.s32 %s70, 1
    %p74 = scmp.eq.s32.totalorder %s10, 2
    %p75 = scmp.ne.s32.totalorder %s70, %s72
    %p76 = scmp.eq.s32.totalorder %s10, 0
    %p77 = por %p75, %p76
    %p78 = scmp.ne.s32.totalorder %s70, %s72
    %p79 = scmp.eq.s32.totalorder %s15, 2
    %p80 = por %p78, %p79
    %p81 = scmp.ne.s32.totalorder %s72, %s73
    %p82 = scmp.eq.s32.totalorder %s15, 0
    %p83 = por %p81, %p82
    %p84 = scmp.ne.s32.totalorder %s72, %s73
    %p85 = scmp.eq.s32.totalorder %s16, 2
    %p86 = por %p84, %p85
    %p88 = scmp.ne.s32.totalorder %s73, %s87
    %p89 = scmp.eq.s32.totalorder %s16, 0
    %p90 = por %p88, %p89
    %p91 = scmp.le.s32.totalorder 1, %s10
    %p92 = scmp.lt.s32.totalorder %s10, 4
    %p93 = pnand %p91, %p92
    %p94 = pneg %p93
    // Predicated region
    $region9: #{gnn_stack_stage.1} parent=5 // pred_check
      _
    $region10: #{gnn_stack_stage.1} parent=5 // pred_check_branch
      %96 = sbr.rel (%p93) target = $region12
    $region11: #{gnn_stack_stage.1} parent=5 // pred_region
      %s97 = ssub.s32 %s10, 1
    $region12: #{gnn_stack_stage.1} parent=5 // pred_fallthru
      _
    %p98 = scmp.lt.s32.totalorder %s10, 3
    // Predicated region
    $region13: #{gnn_stack_stage.1} parent=5 // pred_check
      %p99 = pneg %p98
    $region14: #{gnn_stack_stage.1} parent=5 // pred_check_branch
      %101 = sbr.rel (%p99) target = $region16
    $region15: #{gnn_stack_stage.1} parent=5 // pred_region
      // Predicated region
      $region17: #{gnn_stack_stage.1} parent=15 // pred_check
        %p102 = pneg %p30
      $region18: #{gnn_stack_stage.1} parent=15 // pred_check_branch
        %104 = sbr.rel (%p102) target = $region20
      $region19: #{gnn_stack_stage.1} parent=15 // pred_region
        %p105 = scmp.lt.s32.totalorder %s10, 2
        %s106 = scalar_select %p105, %s10, 2
        %s107 = smul.addr %s106, 16
        %s108 = smul.addr %s107, 4
        %s109 = scalar_lea.vmem %s2, %s108
      $region20: #{gnn_stack_stage.1} parent=15 // pred_fallthru
        _
      // Predicated region
      $region21: #{gnn_stack_stage.1} parent=15 // pred_check
        %p110 = pneg %p56
      $region22: #{gnn_stack_stage.1} parent=15 // pred_check_branch
        %112 = sbr.rel (%p110) target = $region24
      $region23: #{gnn_stack_stage.1} parent=15 // pred_region
        %p113 = scmp.lt.s32.totalorder %s10, 2
        %s114 = scalar_select %p113, %s10, 2
        %s115 = scalar_lea.vmem %s3, %s114
      $region24: #{gnn_stack_stage.1} parent=15 // pred_fallthru
        _
    $region16: #{gnn_stack_stage.1} parent=5 // pred_fallthru
      _
    %p116 = scmp.le.s32.totalorder 1, %s10
    %p117 = scmp.lt.s32.totalorder %s10, 4
    %p118 = pnand %p116, %p117
    %p119 = pneg %p118
    // Predicated region
    $region25: #{gnn_stack_stage.1} parent=5 // pred_check
      _
    $region26: #{gnn_stack_stage.1} parent=5 // pred_check_branch
      %121 = sbr.rel (%p118) target = $region28
    $region27: #{gnn_stack_stage.1} parent=5 // pred_region
      %s122 = ssub.s32 %s10, 1
      %p123 = scmp.lt.s32.totalorder %s15, 2
      %s124 = scalar_select %p123, %s15, 2
      %s125 = smul.addr %s124, 16
      %s126 = smul.addr %s125, 4
      %s127 = scalar_lea.vmem %s2, %s126
      %p128 = pneg %p36
      %p129 = pneg %p33
      %p130 = scmp.lt.s32.totalorder %s15, 2
      %s131 = scalar_select %p130, %s15, 2
      %s132 = scalar_lea.vmem %s3, %s131
      %p133 = pneg %p62
      %p134 = pneg %p59
      %p135 = pneg %p83
      %p136 = pneg %p80
      %p137 = scmp.lt.s32.totalorder %s15, 2
      %s138 = scalar_select %p137, %s15, 2
      %s139 = smul.addr %s138, 16
      %s140 = smul.addr %s139, 4
      %s141 = scalar_lea.vmem %s2, %s140
      %p142 = scmp.lt.s32.totalorder %s15, 2
      %s143 = scalar_select %p142, %s15, 2
      %s144 = scalar_lea.vmem %s3, %s143
      %p146 = scmp.eq.s32.totalorder %s15, 0
      // Predicated region
      $region29: #{gnn_stack_stage.1} parent=27 // pred_check
        %p147 = pneg %p146
      $region30: #{gnn_stack_stage.1} parent=27 // pred_check_branch
        %149 = sbr.rel (%p147) target = $region32
      $region31: #{gnn_stack_stage.1} parent=27 // pred_region
        %p151 = scmp.lt.u32.totalorder 64, 8
        %p152 = pneg %p151
        // Predicated region
        $region33: #{gnn_stack_stage.1} parent=31 // pred_check
          _
        $region34: #{gnn_stack_stage.1} parent=31 // pred_check_branch
          %154 = sbr.rel (%p151) target = $region36
        $region35: #{gnn_stack_stage.1} parent=31 // pred_region
          %s169 = sand.u32 64, 7
          %p170 = scmp.eq.s32.totalorder %s169, 0
          // Predicated region
          $region48: #{gnn_stack_stage.1} parent=35 // pred_check
            %p171 = pneg %p170
          $region49: #{gnn_stack_stage.1} parent=35 // pred_check_branch
            %173 = sbr.rel (%p171) target = $region51
          $region50: #{gnn_stack_stage.1} parent=35 // pred_region
            loop: start=0, step=1, limit=1
            $region52: #{gnn_stack_stage.1} parent=50 // loop_pre_header
              _
            $region53: #{gnn_stack_stage.1} parent=50 // loop_header
              %s175 = sphi 0, %s179
              %p176 = scmp.ge.s32.totalorder %s175, 1
              %s180 = sphi %s0, %s0
              %s181 = sphi [#allocation2], [#allocation2]
            $region54: #{gnn_stack_stage.1} parent=50 // loop_header_branch
              %178 = sbr.rel (%p176) target = $region58
            $region55: #{gnn_stack_stage.1} parent=50 // loop_body
              %v182 = vld [vmem:[%s180] sm:$0xff]
              %183 = vst [vmem:[%s181] sm:$0xff] %v182
              %v184 = vld [vmem:[%s180 + $0x8] sm:$0xff]
              %185 = vst [vmem:[%s181 + $0x8] sm:$0xff] %v184
              %v186 = vld [vmem:[%s180 + $0x10] sm:$0xff]
              %187 = vst [vmem:[%s181 + $0x10] sm:$0xff] %v186
              %v188 = vld [vmem:[%s180 + $0x18] sm:$0xff]
              %189 = vst [vmem:[%s181 + $0x18] sm:$0xff] %v188
              %v190 = vld [vmem:[%s180 + $0x20] sm:$0xff]
              %191 = vst [vmem:[%s181 + $0x20] sm:$0xff] %v190
              %v192 = vld [vmem:[%s180 + $0x28] sm:$0xff]
              %193 = vst [vmem:[%s181 + $0x28] sm:$0xff] %v192
              %v194 = vld [vmem:[%s180 + $0x30] sm:$0xff]
              %195 = vst [vmem:[%s181 + $0x30] sm:$0xff] %v194
              %v196 = vld [vmem:[%s180 + $0x38] sm:$0xff]
              %197 = vst [vmem:[%s181 + $0x38] sm:$0xff] %v196
            $region56: #{gnn_stack_stage.1} parent=50 // loop_footer
              %s179 = sadd.s32 1, %s175
            $region57: #{gnn_stack_stage.1} parent=50 // loop_footer_branch
              %174 = sbr.rel target = $region53
            $region58: #{gnn_stack_stage.1} parent=50 // loop_exit
              _
          $region51: #{gnn_stack_stage.1} parent=35 // pred_fallthru
            _
          %p198 = pneg %p170
          // Predicated region
          $region59: #{gnn_stack_stage.1} parent=35 // pred_check
            _
          $region60: #{gnn_stack_stage.1} parent=35 // pred_check_branch
            %200 = sbr.rel (%p170) target = $region62
          $region61: #{gnn_stack_stage.1} parent=35 // pred_region
            %s201 = sand.u32 64, 7
          $region62: #{gnn_stack_stage.1} parent=35 // pred_fallthru
            _
        $region36: #{gnn_stack_stage.1} parent=31 // pred_fallthru
          _
        // Predicated region
        $region37: #{gnn_stack_stage.1} parent=31 // pred_check
          %p155 = pneg %p151
        $region38: #{gnn_stack_stage.1} parent=31 // pred_check_branch
          %157 = sbr.rel (%p155) target = $region40
        $region39: #{gnn_stack_stage.1} parent=31 // pred_region
          %s158 = sshllo.u32 0, 64
          loop: start=0, step=1, limit=1
          $region41: #{gnn_stack_stage.1} parent=39 // loop_pre_header
            _
          $region42: #{gnn_stack_stage.1} parent=39 // loop_header
            %s160 = sphi 0, %s164
            %p161 = scmp.ge.s32.totalorder %s160, 1
            %s165 = sphi %s0, %s0
            %s166 = sphi [#allocation2], [#allocation2]
          $region43: #{gnn_stack_stage.1} parent=39 // loop_header_branch
            %163 = sbr.rel (%p161) target = $region47
          $region44: #{gnn_stack_stage.1} parent=39 // loop_body
            %v167 = vld [vmem:[%s165] sm:%s158]
            %168 = vst [vmem:[%s166] sm:%s158] %v167
          $region45: #{gnn_stack_stage.1} parent=39 // loop_footer
            %s164 = sadd.s32 1, %s160
          $region46: #{gnn_stack_stage.1} parent=39 // loop_footer_branch
            %159 = sbr.rel target = $region42
          $region47: #{gnn_stack_stage.1} parent=39 // loop_exit
            _
        $region40: #{gnn_stack_stage.1} parent=31 // pred_fallthru
          _
        // Predicated region
        $region63: #{gnn_stack_stage.1} parent=31 // pred_check
          _
        $region64: #{gnn_stack_stage.1} parent=31 // pred_check_branch
          %204 = sbr.rel (0) target = $region66
        $region65: #{gnn_stack_stage.1} parent=31 // pred_region
          %205 = vsyncadd [#allocation4], 1024
        $region66: #{gnn_stack_stage.1} parent=31 // pred_fallthru
          _
        %s206 = scalar_lea.sflag [#allocation4], 1
        %p208 = scmp.lt.u32.totalorder 64, 8
        %p209 = pneg %p208
        // Predicated region
        $region67: #{gnn_stack_stage.1} parent=31 // pred_check
          _
        $region68: #{gnn_stack_stage.1} parent=31 // pred_check_branch
          %211 = sbr.rel (%p208) target = $region70
        $region69: #{gnn_stack_stage.1} parent=31 // pred_region
          %s226 = sand.u32 64, 7
          %p227 = scmp.eq.s32.totalorder %s226, 0
          // Predicated region
          $region82: #{gnn_stack_stage.1} parent=69 // pred_check
            %p228 = pneg %p227
          $region83: #{gnn_stack_stage.1} parent=69 // pred_check_branch
            %230 = sbr.rel (%p228) target = $region85
          $region84: #{gnn_stack_stage.1} parent=69 // pred_region
            loop: start=0, step=1, limit=1
            $region86: #{gnn_stack_stage.1} parent=84 // loop_pre_header
              _
            $region87: #{gnn_stack_stage.1} parent=84 // loop_header
              %s232 = sphi 0, %s236
              %p233 = scmp.ge.s32.totalorder %s232, 1
              %s237 = sphi %s1, %s1
              %s238 = sphi [#allocation3], [#allocation3]
            $region88: #{gnn_stack_stage.1} parent=84 // loop_header_branch
              %235 = sbr.rel (%p233) target = $region92
            $region89: #{gnn_stack_stage.1} parent=84 // loop_body
              %v239 = vld [vmem:[%s237] sm:$0xff]
              %240 = vst [vmem:[%s238] sm:$0xff] %v239
              %v241 = vld [vmem:[%s237 + $0x8] sm:$0xff]
              %242 = vst [vmem:[%s238 + $0x8] sm:$0xff] %v241
              %v243 = vld [vmem:[%s237 + $0x10] sm:$0xff]
              %244 = vst [vmem:[%s238 + $0x10] sm:$0xff] %v243
              %v245 = vld [vmem:[%s237 + $0x18] sm:$0xff]
              %246 = vst [vmem:[%s238 + $0x18] sm:$0xff] %v245
              %v247 = vld [vmem:[%s237 + $0x20] sm:$0xff]
              %248 = vst [vmem:[%s238 + $0x20] sm:$0xff] %v247
              %v249 = vld [vmem:[%s237 + $0x28] sm:$0xff]
              %250 = vst [vmem:[%s238 + $0x28] sm:$0xff] %v249
              %v251 = vld [vmem:[%s237 + $0x30] sm:$0xff]
              %252 = vst [vmem:[%s238 + $0x30] sm:$0xff] %v251
              %v253 = vld [vmem:[%s237 + $0x38] sm:$0xff]
              %254 = vst [vmem:[%s238 + $0x38] sm:$0xff] %v253
            $region90: #{gnn_stack_stage.1} parent=84 // loop_footer
              %s236 = sadd.s32 1, %s232
            $region91: #{gnn_stack_stage.1} parent=84 // loop_footer_branch
              %231 = sbr.rel target = $region87
            $region92: #{gnn_stack_stage.1} parent=84 // loop_exit
              _
          $region85: #{gnn_stack_stage.1} parent=69 // pred_fallthru
            _
          %p255 = pneg %p227
          // Predicated region
          $region93: #{gnn_stack_stage.1} parent=69 // pred_check
            _
          $region94: #{gnn_stack_stage.1} parent=69 // pred_check_branch
            %257 = sbr.rel (%p227) target = $region96
          $region95: #{gnn_stack_stage.1} parent=69 // pred_region
            %s258 = sand.u32 64, 7
          $region96: #{gnn_stack_stage.1} parent=69 // pred_fallthru
            _
        $region70: #{gnn_stack_stage.1} parent=31 // pred_fallthru
          _
        // Predicated region
        $region71: #{gnn_stack_stage.1} parent=31 // pred_check
          %p212 = pneg %p208
        $region72: #{gnn_stack_stage.1} parent=31 // pred_check_branch
          %214 = sbr.rel (%p212) target = $region74
        $region73: #{gnn_stack_stage.1} parent=31 // pred_region
          %s215 = sshllo.u32 0, 64
          loop: start=0, step=1, limit=1
          $region75: #{gnn_stack_stage.1} parent=73 // loop_pre_header
            _
          $region76: #{gnn_stack_stage.1} parent=73 // loop_header
            %s217 = sphi 0, %s221
            %p218 = scmp.ge.s32.totalorder %s217, 1
            %s222 = sphi %s1, %s1
            %s223 = sphi [#allocation3], [#allocation3]
          $region77: #{gnn_stack_stage.1} parent=73 // loop_header_branch
            %220 = sbr.rel (%p218) target = $region81
          $region78: #{gnn_stack_stage.1} parent=73 // loop_body
            %v224 = vld [vmem:[%s222] sm:%s215]
            %225 = vst [vmem:[%s223] sm:%s215] %v224
          $region79: #{gnn_stack_stage.1} parent=73 // loop_footer
            %s221 = sadd.s32 1, %s217
          $region80: #{gnn_stack_stage.1} parent=73 // loop_footer_branch
            %216 = sbr.rel target = $region76
          $region81: #{gnn_stack_stage.1} parent=73 // loop_exit
            _
        $region74: #{gnn_stack_stage.1} parent=31 // pred_fallthru
          _
        // Predicated region
        $region97: #{gnn_stack_stage.1} parent=31 // pred_check
          _
        $region98: #{gnn_stack_stage.1} parent=31 // pred_check_branch
          %261 = sbr.rel (0) target = $region100
        $region99: #{gnn_stack_stage.1} parent=31 // pred_region
          %262 = vsyncadd %s206, 1024
        $region100: #{gnn_stack_stage.1} parent=31 // pred_fallthru
          _
        %s263 = smul.u32 4, 16
        %s264 = smul.u32 %s263, 1
        %s265 = sshll.u32 %s264, 4
        %266 = dma.done [#allocation4], %s265
        %s267 = sshll.u32 %s264, 4
        %268 = dma.done %s206, %s267
      $region32: #{gnn_stack_stage.1} parent=27 // pred_fallthru
        _
      %v269 = vld [vmem:[#allocation3] sm:$0xff]
      %v270 = vld [vmem:[#allocation3 + $0x8] sm:$0xff]
      %v271 = vld [vmem:[#allocation3 + $0x10] sm:$0xff]
      %v272 = vld [vmem:[#allocation3 + $0x18] sm:$0xff]
      %v273 = vld [vmem:[#allocation3 + $0x20] sm:$0xff]
      %v274 = vld [vmem:[#allocation3 + $0x28] sm:$0xff]
      %v275 = vld [vmem:[#allocation3 + $0x30] sm:$0xff]
      %v276 = vld [vmem:[#allocation3 + $0x38] sm:$0xff]
      %v277 = vld [vmem:[%s141] sm:$0xf]
      %v278 = vld [vmem:[%s141 + $0x4] sm:$0xf]
      %v279 = vld [vmem:[%s141 + $0x8] sm:$0xf]
      %v280 = vld [vmem:[%s141 + $0xc] sm:$0xf]
      %v281 = vld [vmem:[%s141 + $0x10] sm:$0xf]
      %v282 = vld [vmem:[%s141 + $0x14] sm:$0xf]
      %v283 = vld [vmem:[%s141 + $0x18] sm:$0xf]
      %v284 = vld [vmem:[%s141 + $0x1c] sm:$0xf]
      %v285 = vld [vmem:[%s141 + $0x20] sm:$0xf]
      %v286 = vld [vmem:[%s141 + $0x24] sm:$0xf]
      %v287 = vld [vmem:[%s141 + $0x28] sm:$0xf]
      %v288 = vld [vmem:[%s141 + $0x2c] sm:$0xf]
      %v289 = vld [vmem:[%s141 + $0x30] sm:$0xf]
      %v290 = vld [vmem:[%s141 + $0x34] sm:$0xf]
      %v291 = vld [vmem:[%s141 + $0x38] sm:$0xf]
      %v292 = vld [vmem:[%s141 + $0x3c] sm:$0xf]
      %v309 = vunpack.c.l.b16 %v277
      %v310 = vunpack.c.l.b16 %v278
      %v311 = vunpack.c.l.b16 %v279
      %v312 = vunpack.c.l.b16 %v280
      %v313 = vunpack.c.l.b16 %v281
      %v314 = vunpack.c.l.b16 %v282
      %v315 = vunpack.c.l.b16 %v283
      %v316 = vunpack.c.l.b16 %v284
      %v317 = vunpack.c.l.b16 %v285
      %v318 = vunpack.c.l.b16 %v286
      %v319 = vunpack.c.l.b16 %v287
      %v320 = vunpack.c.l.b16 %v288
      %v321 = vunpack.c.l.b16 %v289
      %v322 = vunpack.c.l.b16 %v290
      %v323 = vunpack.c.l.b16 %v291
      %v324 = vunpack.c.l.b16 %v292
      %v325 = vpack.c.b16 %v310, %v309
      %v326 = vpack.c.b16 %v312, %v311
      %v327 = vpack.c.b16 %v314, %v313
      %v328 = vpack.c.b16 %v316, %v315
      %v329 = vpack.c.b16 %v318, %v317
      %v330 = vpack.c.b16 %v320, %v319
      %v331 = vpack.c.b16 %v322, %v321
      %v332 = vpack.c.b16 %v324, %v323
      %341 = vmatprep.subr.bf16.mxu0 0
      %342 = vmatpush1.bf16.msra.mxu0 %v325
      %343 = vmatprep.subr.bf16.mxu0 0
      %344 = vmatpush1.bf16.msra.mxu0 %v326
      %345 = vmatprep.subr.bf16.mxu0 0
      %346 = vmatpush1.bf16.msra.mxu0 %v327
      %347 = vmatprep.subr.bf16.mxu0 0
      %348 = vmatpush1.bf16.msra.mxu0 %v328
      %349 = vmatprep.subr.bf16.mxu0 0
      %350 = vmatpush1.bf16.msra.mxu0 %v329
      %351 = vmatprep.subr.bf16.mxu0 0
      %352 = vmatpush1.bf16.msra.mxu0 %v330
      %353 = vmatprep.subr.bf16.mxu0 0
      %354 = vmatpush1.bf16.msra.mxu0 %v331
      %355 = vmatprep.subr.bf16.mxu0 0
      %356 = vmatpush1.bf16.msra.mxu0 %v332
      %357 = vmatprep.subr.bf16.mxu0 0
      %358 = vmatpush1.bf16.msra.mxu0 0
      %359 = vmatprep.subr.bf16.mxu0 0
      %360 = vmatpush1.bf16.msra.mxu0 0
      %361 = vmatprep.subr.bf16.mxu0 0
      %362 = vmatpush1.bf16.msra.mxu0 0
      %363 = vmatprep.subr.bf16.mxu0 0
      %364 = vmatpush1.bf16.msra.mxu0 0
      %365 = vmatprep.subr.bf16.mxu0 0
      %366 = vmatpush1.bf16.msra.mxu0 0
      %367 = vmatprep.subr.bf16.mxu0 0
      %368 = vmatpush1.bf16.msra.mxu0 0
      %369 = vmatprep.subr.bf16.mxu0 0
      %370 = vmatpush1.bf16.msra.mxu0 0
      %371 = vmatprep.subr.bf16.mxu0 0
      %372 = vmatpush1.bf16.msra.mxu0 0
      %373 = vmatprep.mubr.bf16.mxu0 0
      %374 = vmatmul.mubr.bf16.gmra.mrb[0].mxu0 %v269
      %v375 = vpop.f32.mrb[0].mxu0
      %v376 = vadd.f32 0.0, %v375
      %v377 = vpop.f32.mrb[0].mxu0
      %v378 = vpop.f32.mrb[0].mxu0
      %v379 = vadd.f32 0.0, %v378
      %v380 = vpop.f32.mrb[0].mxu0
      %381 = vmatprep.mubr.bf16.mxu0 0
      %382 = vmatmul.mubr.bf16.gmra.mrb[0].mxu0 %v270
      %v383 = vpop.f32.mrb[0].mxu0
      %v384 = vadd.f32 0.0, %v383
      %v385 = vpop.f32.mrb[0].mxu0
      %v386 = vpop.f32.mrb[0].mxu0
      %v387 = vadd.f32 0.0, %v386
      %v388 = vpop.f32.mrb[0].mxu0
      %389 = vmatprep.mubr.bf16.mxu0 0
      %390 = vmatmul.mubr.bf16.gmra.mrb[0].mxu0 %v271
      %v391 = vpop.f32.mrb[0].mxu0
      %v392 = vadd.f32 0.0, %v391
      %v393 = vpop.f32.mrb[0].mxu0
      %v394 = vpop.f32.mrb[0].mxu0
      %v395 = vadd.f32 0.0, %v394
      %v396 = vpop.f32.mrb[0].mxu0
      %397 = vmatprep.mubr.bf16.mxu0 0
      %398 = vmatmul.mubr.bf16.gmra.mrb[0].mxu0 %v272
      %v399 = vpop.f32.mrb[0].mxu0
      %v400 = vadd.f32 0.0, %v399
      %v401 = vpop.f32.mrb[0].mxu0
      %v402 = vpop.f32.mrb[0].mxu0
      %v403 = vadd.f32 0.0, %v402
      %v404 = vpop.f32.mrb[0].mxu0
      %405 = vmatprep.mubr.bf16.mxu0 0
      %406 = vmatmul.mubr.bf16.gmra.mrb[0].mxu0 %v273
      %v407 = vpop.f32.mrb[0].mxu0
      %v408 = vadd.f32 0.0, %v407
      %v409 = vpop.f32.mrb[0].mxu0
      %v410 = vpop.f32.mrb[0].mxu0
      %v411 = vadd.f32 0.0, %v410
      %v412 = vpop.f32.mrb[0].mxu0
      %413 = vmatprep.mubr.bf16.mxu0 0
      %414 = vmatmul.mubr.bf16.gmra.mrb[0].mxu0 %v274
      %v415 = vpop.f32.mrb[0].mxu0
      %v416 = vadd.f32 0.0, %v415
      %v417 = vpop.f32.mrb[0].mxu0
      %v418 = vpop.f32.mrb[0].mxu0
      %v419 = vadd.f32 0.0, %v418
      %v420 = vpop.f32.mrb[0].mxu0
      %421 = vmatprep.mubr.bf16.mxu0 0
      %422 = vmatmul.mubr.bf16.gmra.mrb[0].mxu0 %v275
      %v423 = vpop.f32.mrb[0].mxu0
      %v424 = vadd.f32 0.0, %v423
      %v425 = vpop.f32.mrb[0].mxu0
      %v426 = vpop.f32.mrb[0].mxu0
      %v427 = vadd.f32 0.0, %v426
      %v428 = vpop.f32.mrb[0].mxu0
      %429 = vmatprep.mubr.bf16.mxu0 0
      %430 = vmatmul.mubr.bf16.gmra.mrb[0].mxu0 %v276
      %v431 = vpop.f32.mrb[0].mxu0
      %v432 = vadd.f32 0.0, %v431
      %v433 = vpop.f32.mrb[0].mxu0
      %v434 = vpop.f32.mrb[0].mxu0
      %v435 = vadd.f32 0.0, %v434
      %v436 = vpop.f32.mrb[0].mxu0
      %437 = vdwg.mxu0
      %v438 = vld [vmem:[#allocation2] sm:$0xff]
      %v439 = vld [vmem:[#allocation2 + $0x8] sm:$0xff]
      %v440 = vld [vmem:[#allocation2 + $0x10] sm:$0xff]
      %v441 = vld [vmem:[#allocation2 + $0x18] sm:$0xff]
      %v442 = vld [vmem:[#allocation2 + $0x20] sm:$0xff]
      %v443 = vld [vmem:[#allocation2 + $0x28] sm:$0xff]
      %v444 = vld [vmem:[#allocation2 + $0x30] sm:$0xff]
      %v445 = vld [vmem:[#allocation2 + $0x38] sm:$0xff]
      %v446 = vpack.c.bf16 %v379, %v376
      %v447 = vpack.c.bf16 %v387, %v384
      %v448 = vpack.c.bf16 %v395, %v392
      %v449 = vpack.c.bf16 %v403, %v400
      %v450 = vpack.c.bf16 %v411, %v408
      %v451 = vpack.c.bf16 %v419, %v416
      %v452 = vpack.c.bf16 %v427, %v424
      %v453 = vpack.c.bf16 %v435, %v432
      %v454 = vld [vmem:[%s144] sm:$0x1]
      %v456 = vlaneseq
      %v457 = vshrl.u32 %v456, 7
      %v458 = vsub.s32 0, %v457
      %v459 = vrot.slane %v454, %v458
      %461 = vmatprep.subr.bf16.mxu0 0
      %462 = vmatpush1.bf16.msra.mxu0 %v446
      %463 = vmatprep.subr.bf16.mxu0 0
      %464 = vmatpush1.bf16.msra.mxu0 %v447
      %465 = vmatprep.subr.bf16.mxu0 0
      %466 = vmatpush1.bf16.msra.mxu0 %v448
      %467 = vmatprep.subr.bf16.mxu0 0
      %468 = vmatpush1.bf16.msra.mxu0 %v449
      %469 = vmatprep.subr.bf16.mxu0 0
      %470 = vmatpush1.bf16.msra.mxu0 %v450
      %471 = vmatprep.subr.bf16.mxu0 0
      %472 = vmatpush1.bf16.msra.mxu0 %v451
      %473 = vmatprep.subr.bf16.mxu0 0
      %474 = vmatpush1.bf16.msra.mxu0 %v452
      %475 = vmatprep.subr.bf16.mxu0 0
      %476 = vmatpush1.bf16.msra.mxu0 %v453
      %477 = vmatprep.subr.bf16.mxu0 0
      %478 = vmatpush1.bf16.msra.mxu0 0
      %479 = vmatprep.subr.bf16.mxu0 0
      %480 = vmatpush1.bf16.msra.mxu0 0
      %481 = vmatprep.subr.bf16.mxu0 0
      %482 = vmatpush1.bf16.msra.mxu0 0
      %483 = vmatprep.subr.bf16.mxu0 0
      %484 = vmatpush1.bf16.msra.mxu0 0
      %485 = vmatprep.subr.bf16.mxu0 0
      %486 = vmatpush1.bf16.msra.mxu0 0
      %487 = vmatprep.subr.bf16.mxu0 0
      %488 = vmatpush1.bf16.msra.mxu0 0
      %489 = vmatprep.subr.bf16.mxu0 0
      %490 = vmatpush1.bf16.msra.mxu0 0
      %491 = vmatprep.subr.bf16.mxu0 0
      %492 = vmatpush1.bf16.msra.mxu0 0
      %493 = vmatprep.mubr.bf16.mxu0 0
      %494 = vmatmul.mubr.bf16.gmra.mrb[0].mxu0 %v438
      %v495 = vpop.f32.mrb[0].mxu0
      %v496 = vadd.f32 %v459, %v495
      %v497 = vpop.f32.mrb[0].mxu0
      %v498 = vpop.f32.mrb[0].mxu0
      %v499 = vadd.f32 %v459, %v498
      %v500 = vpop.f32.mrb[0].mxu0
      %501 = vmatprep.mubr.bf16.mxu0 0
      %502 = vmatmul.mubr.bf16.gmra.mrb[0].mxu0 %v439
      %v503 = vpop.f32.mrb[0].mxu0
      %v504 = vadd.f32 %v459, %v503
      %v505 = vpop.f32.mrb[0].mxu0
      %v506 = vpop.f32.mrb[0].mxu0
      %v507 = vadd.f32 %v459, %v506
      %v508 = vpop.f32.mrb[0].mxu0
      %509 = vmatprep.mubr.bf16.mxu0 0
      %510 = vmatmul.mubr.bf16.gmra.mrb[0].mxu0 %v440
      %v511 = vpop.f32.mrb[0].mxu0
      %v512 = vadd.f32 %v459, %v511
      %v513 = vpop.f32.mrb[0].mxu0
      %v514 = vpop.f32.mrb[0].mxu0
      %v515 = vadd.f32 %v459, %v514
      %v516 = vpop.f32.mrb[0].mxu0
      %517 = vmatprep.mubr.bf16.mxu0 0
      %518 = vmatmul.mubr.bf16.gmra.mrb[0].mxu0 %v441
      %v519 = vpop.f32.mrb[0].mxu0
      %v520 = vadd.f32 %v459, %v519
      %v521 = vpop.f32.mrb[0].mxu0
      %v522 = vpop.f32.mrb[0].mxu0
      %v523 = vadd.f32 %v459, %v522
      %v524 = vpop.f32.mrb[0].mxu0
      %525 = vmatprep.mubr.bf16.mxu0 0
      %526 = vmatmul.mubr.bf16.gmra.mrb[0].mxu0 %v442
      %v527 = vpop.f32.mrb[0].mxu0
      %v528 = vadd.f32 %v459, %v527
      %v529 = vpop.f32.mrb[0].mxu0
      %v530 = vpop.f32.mrb[0].mxu0
      %v531 = vadd.f32 %v459, %v530
      %v532 = vpop.f32.mrb[0].mxu0
      %533 = vmatprep.mubr.bf16.mxu0 0
      %534 = vmatmul.mubr.bf16.gmra.mrb[0].mxu0 %v443
      %v535 = vpop.f32.mrb[0].mxu0
      %v536 = vadd.f32 %v459, %v535
      %v537 = vpop.f32.mrb[0].mxu0
      %v538 = vpop.f32.mrb[0].mxu0
      %v539 = vadd.f32 %v459, %v538
      %v540 = vpop.f32.mrb[0].mxu0
      %541 = vmatprep.mubr.bf16.mxu0 0
      %542 = vmatmul.mubr.bf16.gmra.mrb[0].mxu0 %v444
      %v543 = vpop.f32.mrb[0].mxu0
      %v544 = vadd.f32 %v459, %v543
      %v545 = vpop.f32.mrb[0].mxu0
      %v546 = vpop.f32.mrb[0].mxu0
      %v547 = vadd.f32 %v459, %v546
      %v548 = vpop.f32.mrb[0].mxu0
      %549 = vmatprep.mubr.bf16.mxu0 0
      %550 = vmatmul.mubr.bf16.gmra.mrb[0].mxu0 %v445
      %v551 = vpop.f32.mrb[0].mxu0
      %v552 = vadd.f32 %v459, %v551
      %v553 = vpop.f32.mrb[0].mxu0
      %v554 = vpop.f32.mrb[0].mxu0
      %v555 = vadd.f32 %v459, %v554
      %v556 = vpop.f32.mrb[0].mxu0
      %557 = vdwg.mxu0
      %v558 = vmax.f32 %v496, 0.0
      %v559 = vmax.f32 %v499, 0.0
      %v560 = vmax.f32 %v504, 0.0
      %v561 = vmax.f32 %v507, 0.0
      %v562 = vmax.f32 %v512, 0.0
      %v563 = vmax.f32 %v515, 0.0
      %v564 = vmax.f32 %v520, 0.0
      %v565 = vmax.f32 %v523, 0.0
      %v566 = vmax.f32 %v528, 0.0
      %v567 = vmax.f32 %v531, 0.0
      %v568 = vmax.f32 %v536, 0.0
      %v569 = vmax.f32 %v539, 0.0
      %v570 = vmax.f32 %v544, 0.0
      %v571 = vmax.f32 %v547, 0.0
      %v572 = vmax.f32 %v552, 0.0
      %v573 = vmax.f32 %v555, 0.0
      %v574 = vpack.c.bf16 %v559, %v558
      %v575 = vpack.c.bf16 %v561, %v560
      %v576 = vpack.c.bf16 %v563, %v562
      %v577 = vpack.c.bf16 %v565, %v564
      %v578 = vpack.c.bf16 %v567, %v566
      %v579 = vpack.c.bf16 %v569, %v568
      %v580 = vpack.c.bf16 %v571, %v570
      %v581 = vpack.c.bf16 %v573, %v572
      %582 = vst [vmem:[#allocation3] sm:$0xff] %v574
      %583 = vst [vmem:[#allocation3 + $0x8] sm:$0xff] %v575
      %584 = vst [vmem:[#allocation3 + $0x10] sm:$0xff] %v576
      %585 = vst [vmem:[#allocation3 + $0x18] sm:$0xff] %v577
      %586 = vst [vmem:[#allocation3 + $0x20] sm:$0xff] %v578
      %587 = vst [vmem:[#allocation3 + $0x28] sm:$0xff] %v579
      %588 = vst [vmem:[#allocation3 + $0x30] sm:$0xff] %v580
      %589 = vst [vmem:[#allocation3 + $0x38] sm:$0xff] %v581
      %p590 = scmp.eq.s32.totalorder %s15, 2
      // Predicated region
      $region101: #{gnn_stack_stage.1} parent=27 // pred_check
        %p591 = pneg %p590
      $region102: #{gnn_stack_stage.1} parent=27 // pred_check_branch
        %593 = sbr.rel (%p591) target = $region104
      $region103: #{gnn_stack_stage.1} parent=27 // pred_region
        %v594 = vmul.f32 %v558, %v558
        %v595 = vmul.f32 %v559, %v559
        %v596 = vmul.f32 %v560, %v560
        %v597 = vmul.f32 %v561, %v561
        %v598 = vmul.f32 %v562, %v562
        %v599 = vmul.f32 %v563, %v563
        %v600 = vmul.f32 %v564, %v564
        %v601 = vmul.f32 %v565, %v565
        %v602 = vmul.f32 %v566, %v566
        %v603 = vmul.f32 %v567, %v567
        %v604 = vmul.f32 %v568, %v568
        %v605 = vmul.f32 %v569, %v569
        %v606 = vmul.f32 %v570, %v570
        %v607 = vmul.f32 %v571, %v571
        %v608 = vmul.f32 %v572, %v572
        %v609 = vmul.f32 %v573, %v573
        %610 = vadd.xlane.f32.xlu0 %v594
        %v611 = vpop.xlane.xlu0 %610
        %612 = vadd.xlane.f32.xlu0 %v595
        %v613 = vpop.xlane.xlu0 %612
        %614 = vadd.xlane.f32.xlu0 %v596
        %v615 = vpop.xlane.xlu0 %614
        %616 = vadd.xlane.f32.xlu0 %v597
        %v617 = vpop.xlane.xlu0 %616
        %618 = vadd.xlane.f32.xlu0 %v598
        %v619 = vpop.xlane.xlu0 %618
        %620 = vadd.xlane.f32.xlu0 %v599
        %v621 = vpop.xlane.xlu0 %620
        %622 = vadd.xlane.f32.xlu0 %v600
        %v623 = vpop.xlane.xlu0 %622
        %624 = vadd.xlane.f32.xlu0 %v601
        %v625 = vpop.xlane.xlu0 %624
        %626 = vadd.xlane.f32.xlu0 %v602
        %v627 = vpop.xlane.xlu0 %626
        %628 = vadd.xlane.f32.xlu0 %v603
        %v629 = vpop.xlane.xlu0 %628
        %630 = vadd.xlane.f32.xlu0 %v604
        %v631 = vpop.xlane.xlu0 %630
        %632 = vadd.xlane.f32.xlu0 %v605
        %v633 = vpop.xlane.xlu0 %632
        %634 = vadd.xlane.f32.xlu0 %v606
        %v635 = vpop.xlane.xlu0 %634
        %636 = vadd.xlane.f32.xlu0 %v607
        %v637 = vpop.xlane.xlu0 %636
        %638 = vadd.xlane.f32.xlu0 %v608
        %v639 = vpop.xlane.xlu0 %638
        %640 = vadd.xlane.f32.xlu0 %v609
        %v641 = vpop.xlane.xlu0 %640
        %v642 = vmax.f32 %v611, 1e-24
        %v643 = vmax.f32 %v613, 1e-24
        %v644 = vmax.f32 %v615, 1e-24
        %v645 = vmax.f32 %v617, 1e-24
        %v646 = vmax.f32 %v619, 1e-24
        %v647 = vmax.f32 %v621, 1e-24
        %v648 = vmax.f32 %v623, 1e-24
        %v649 = vmax.f32 %v625, 1e-24
        %v650 = vmax.f32 %v627, 1e-24
        %v651 = vmax.f32 %v629, 1e-24
        %v652 = vmax.f32 %v631, 1e-24
        %v653 = vmax.f32 %v633, 1e-24
        %v654 = vmax.f32 %v635, 1e-24
        %v655 = vmax.f32 %v637, 1e-24
        %v656 = vmax.f32 %v639, 1e-24
        %v657 = vmax.f32 %v641, 1e-24
        %v658 = vrsqrt.pop %v642
        %v659 = vrsqrt.pop %v643
        %v660 = vrsqrt.pop %v644
        %v661 = vrsqrt.pop %v645
        %v662 = vrsqrt.pop %v646
        %v663 = vrsqrt.pop %v647
        %v664 = vrsqrt.pop %v648
        %v665 = vrsqrt.pop %v649
        %v666 = vrsqrt.pop %v650
        %v667 = vrsqrt.pop %v651
        %v668 = vrsqrt.pop %v652
        %v669 = vrsqrt.pop %v653
        %v670 = vrsqrt.pop %v654
        %v671 = vrsqrt.pop %v655
        %v672 = vrsqrt.pop %v656
        %v673 = vrsqrt.pop %v657
        %v674 = vmul.f32 %v558, %v658
        %v675 = vmul.f32 %v559, %v659
        %v676 = vmul.f32 %v560, %v660
        %v677 = vmul.f32 %v561, %v661
        %v678 = vmul.f32 %v562, %v662
        %v679 = vmul.f32 %v563, %v663
        %v680 = vmul.f32 %v564, %v664
        %v681 = vmul.f32 %v565, %v665
        %v682 = vmul.f32 %v566, %v666
        %v683 = vmul.f32 %v567, %v667
        %v684 = vmul.f32 %v568, %v668
        %v685 = vmul.f32 %v569, %v669
        %v686 = vmul.f32 %v570, %v670
        %v687 = vmul.f32 %v571, %v671
        %v688 = vmul.f32 %v572, %v672
        %v689 = vmul.f32 %v573, %v673
        %v690 = vpack.c.bf16 %v675, %v674
        %v691 = vpack.c.bf16 %v677, %v676
        %v692 = vpack.c.bf16 %v679, %v678
        %v693 = vpack.c.bf16 %v681, %v680
        %v694 = vpack.c.bf16 %v683, %v682
        %v695 = vpack.c.bf16 %v685, %v684
        %v696 = vpack.c.bf16 %v687, %v686
        %v697 = vpack.c.bf16 %v689, %v688
        %v706 = vunpack.c.l.b16 %v690
        %v707 = vunpack.c.h.b16 %v690
        %v708 = vunpack.c.l.b16 %v691
        %v709 = vunpack.c.h.b16 %v691
        %v710 = vunpack.c.l.b16 %v692
        %v711 = vunpack.c.h.b16 %v692
        %v712 = vunpack.c.l.b16 %v693
        %v713 = vunpack.c.h.b16 %v693
        %v714 = vunpack.c.l.b16 %v694
        %v715 = vunpack.c.h.b16 %v694
        %v716 = vunpack.c.l.b16 %v695
        %v717 = vunpack.c.h.b16 %v695
        %v718 = vunpack.c.l.b16 %v696
        %v719 = vunpack.c.h.b16 %v696
        %v720 = vunpack.c.l.b16 %v697
        %v721 = vunpack.c.h.b16 %v697
        %v722 = vpack.c.b16 %v706, %v706
        %v723 = vpack.c.b16 %v707, %v707
        %v724 = vpack.c.b16 %v708, %v708
        %v725 = vpack.c.b16 %v709, %v709
        %v726 = vpack.c.b16 %v710, %v710
        %v727 = vpack.c.b16 %v711, %v711
        %v728 = vpack.c.b16 %v712, %v712
        %v729 = vpack.c.b16 %v713, %v713
        %v730 = vpack.c.b16 %v714, %v714
        %v731 = vpack.c.b16 %v715, %v715
        %v732 = vpack.c.b16 %v716, %v716
        %v733 = vpack.c.b16 %v717, %v717
        %v734 = vpack.c.b16 %v718, %v718
        %v735 = vpack.c.b16 %v719, %v719
        %v736 = vpack.c.b16 %v720, %v720
        %v737 = vpack.c.b16 %v721, %v721
        %754 = vst [vmem:[%s4] sm:$0xf] %v722
        %755 = vst [vmem:[%s4 + $0x4] sm:$0xf] %v723
        %756 = vst [vmem:[%s4 + $0x8] sm:$0xf] %v724
        %757 = vst [vmem:[%s4 + $0xc] sm:$0xf] %v725
        %758 = vst [vmem:[%s4 + $0x10] sm:$0xf] %v726
        %759 = vst [vmem:[%s4 + $0x14] sm:$0xf] %v727
        %760 = vst [vmem:[%s4 + $0x18] sm:$0xf] %v728
        %761 = vst [vmem:[%s4 + $0x1c] sm:$0xf] %v729
        %762 = vst [vmem:[%s4 + $0x20] sm:$0xf] %v730
        %763 = vst [vmem:[%s4 + $0x24] sm:$0xf] %v731
        %764 = vst [vmem:[%s4 + $0x28] sm:$0xf] %v732
        %765 = vst [vmem:[%s4 + $0x2c] sm:$0xf] %v733
        %766 = vst [vmem:[%s4 + $0x30] sm:$0xf] %v734
        %767 = vst [vmem:[%s4 + $0x34] sm:$0xf] %v735
        %768 = vst [vmem:[%s4 + $0x38] sm:$0xf] %v736
        %769 = vst [vmem:[%s4 + $0x3c] sm:$0xf] %v737
      $region104: #{gnn_stack_stage.1} parent=27 // pred_fallthru
        _
      // Predicated region
      $region105: #{gnn_stack_stage.1} parent=27 // pred_check
        %p770 = pneg %p80
      $region106: #{gnn_stack_stage.1} parent=27 // pred_check_branch
        %772 = sbr.rel (%p770) target = $region108
      $region107: #{gnn_stack_stage.1} parent=27 // pred_region
        _
      $region108: #{gnn_stack_stage.1} parent=27 // pred_fallthru
        _
      // Predicated region
      $region109: #{gnn_stack_stage.1} parent=27 // pred_check
        %p773 = pneg %p80
      $region110: #{gnn_stack_stage.1} parent=27 // pred_check_branch
        %775 = sbr.rel (%p773) target = $region112
      $region111: #{gnn_stack_stage.1} parent=27 // pred_region
        _
      $region112: #{gnn_stack_stage.1} parent=27 // pred_fallthru
        _
    $region28: #{gnn_stack_stage.1} parent=5 // pred_fallthru
      _
    %p776 = scmp.le.s32.totalorder 2, %s10
    // Predicated region
    $region113: #{gnn_stack_stage.1} parent=5 // pred_check
      %p777 = pneg %p776
    $region114: #{gnn_stack_stage.1} parent=5 // pred_check_branch
      %779 = sbr.rel (%p777) target = $region116
    $region115: #{gnn_stack_stage.1} parent=5 // pred_region
      %s780 = ssub.s32 %s10, 2
    $region116: #{gnn_stack_stage.1} parent=5 // pred_fallthru
      _
  $region6: #{gnn_stack_stage.1} parent=0 // loop_footer
    %s14 = sadd.s32 1, %s10
  $region7: #{gnn_stack_stage.1} parent=0 // loop_footer_branch
    %9 = sbr.rel target = $region3
  $region8: #{gnn_stack_stage.1} parent=0 // loop_exit
    _
  %781 = vsyncmov [#allocation4]
  %s782 = vpop.sfrf %781
  %p783 = scmp.eq.s32.totalorder %s782, 0
  %p784 = pneg %p783
  %786 = shalt.err (%p784)
  %s787 = scalar_lea.sflag [#allocation4], 1
  %788 = vsyncmov %s787
  %s789 = vpop.sfrf %788
  %p790 = scmp.eq.s32.totalorder %s789, 0
  %p791 = pneg %p790
  %793 = shalt.err (%p791)

</llo_original>
